<compile_context>
chip_gen: v6e
topology: v6e:2x2x1
jax: 0.10.0
libtpu: 0.0.40
codegen_flags: <defaults>
</compile_context>

<pallas_src>
import functools
import math

import jax
import jax.numpy as jnp
from jax.experimental import pallas as pl
from jax.experimental.pallas import tpu as pltpu


_TARGET_BLOCK_BYTES = 4 << 20          # aim for ~4 MiB per pipelined block


def _eca_kernel_size(channel: int, b: int = 1, gamma: int = 2) -> int:
    k = int(abs((math.log(channel, 2) + b) / gamma))
    k = k if k % 2 else k + 1
    return k


def _round_up(x: int, m: int) -> int:
    return (x + m - 1) // m * m


def _tpu_vmem_and_cores():
    """(per-core VMEM bytes, TensorCores per chip), defensive about field names."""
    vmem_cap = 128 << 20
    n_cores = 1
    try:
        info = pltpu.get_tpu_info()
    except Exception:
        info = None
    if info is not None:
        v = getattr(info, "vmem_capacity_bytes", None)
        try:
            if v:
                vmem_cap = int(v)
        except Exception:
            pass
        for name in ("num_tensorcores", "tensorcore_count", "num_cores"):
            c = getattr(info, name, None)
            if isinstance(c, int) and 0 < c <= 8:
                n_cores = c
                break
    if vmem_cap <= (64 << 20):
        n_cores = max(n_cores, 2)      # 64-MiB-per-core parts (v7x) have 2 TCs
    return vmem_cap, n_cores


def _budgets(vmem_cap):
    """(data VMEM budget for double-buffered blocks, vmem_limit_bytes cap)."""
    if vmem_cap >= (100 << 20):        # v5e / v6e class: 128 MiB VMEM
        return 96 << 20, 112 << 20
    return 44 << 20, 56 << 20          # v7x class: 64 MiB VMEM, ~10% headroom


# ----------------------------- in-kernel helpers -----------------------------

def _gate_from_pooled(pooled, w_ref, k):
    """pooled: (TB, C, 1) f32 channel means -> sigmoid(conv1d_k(pooled)), (TB, C, 1) f32.

    conv[c] = sum_j w[j] * pooled[c + j - pad], zero padding at the channel edges.
    """
    C = pooled.shape[1]
    pad = (k - 1) // 2
    c_idx = jax.lax.broadcasted_iota(jnp.int32, pooled.shape, 1)
    conv = jnp.zeros_like(pooled)
    for j in range(k):                         # k is tiny & static -> unrolled
        d = j - pad
        if abs(d) >= C:                        # tap lands entirely in the zero pad
            continue
        w_j = w_ref[j]                         # scalar read from SMEM
        if d == 0:
            conv = conv + w_j * pooled
        else:
            rolled = pltpu.roll(pooled, (-d) % C, axis=1)    # rolled[c] = pooled[(c+d) % C]
            # only one edge can be invalid for a given tap sign
            valid = (c_idx < C - d) if d > 0 else (c_idx >= -d)
            conv = conv + w_j * jnp.where(valid, rolled, 0.0)
    return jax.nn.sigmoid(conv)


# --------------------------------- kernels -----------------------------------

def _se_fused_kernel(w_ref, x_ref, o_ref, *, k, inv_hw):
    # w_ref: (k,) f32 SMEM; x_ref/o_ref: (TB, C, HW) in the input dtype.
    pooled = jnp.sum(x_ref[...], axis=-1, keepdims=True,
                     dtype=jnp.float32) * inv_hw                  # (TB, C, 1) f32
    gate = _gate_from_pooled(pooled, w_ref, k)                    # (TB, C, 1) f32
    o_ref[...] = x_ref[...] * gate.astype(o_ref.dtype)


def _se_ctile_kernel(w_ref, x_ref, lo_ref, hi_ref, o_ref, *, k, inv_hw, n_channels):
    # Channel-tiled single pass: each block pools its own channels plus a small
    # +/- halo of channels, computes the gate locally, and multiplies.
    c_tile = x_ref.shape[1]
    halo_c = lo_ref.shape[1]
    pad = (k - 1) // 2
    ci = pl.program_id(1)

    pooled_own = jnp.sum(x_ref[...], axis=-1, keepdims=True, dtype=jnp.float32) * inv_hw
    pooled_lo = jnp.sum(lo_ref[...], axis=-1, keepdims=True, dtype=jnp.float32) * inv_hw
    pooled_hi = jnp.sum(hi_ref[...], axis=-1, keepdims=True, dtype=jnp.float32) * inv_hw

    # Zero out halo channels that fall outside [0, C) (reproduces zero padding;
    # also neutralizes the clamped index_map reads at the edges).
    sub = jax.lax.broadcasted_iota(jnp.int32, pooled_lo.shape, 1)
    lo_base = ci * c_tile - halo_c
    hi_base = (ci + 1) * c_tile
    pooled_lo = jnp.where(lo_base + sub >= 0, pooled_lo, 0.0)
    pooled_hi = jnp.where(hi_base + sub < n_channels, pooled_hi, 0.0)

    ext = jnp.concatenate([pooled_lo, pooled_own, pooled_hi], axis=1)  # (1, c_tile+2*halo_c, 1)
    E = c_tile + 2 * halo_c
    conv = jnp.zeros_like(ext)
    for j in range(k):                         # wrap-around only touches discarded rows
        d = j - pad
        w_j = w_ref[j]
        if d == 0:
            conv = conv + w_j * ext
        else:
            conv = conv + w_j * pltpu.roll(ext, (-d) % E, axis=1)
    gate = jax.nn.sigmoid(conv[:, halo_c:halo_c + c_tile, :])         # (1, c_tile, 1)
    o_ref[...] = x_ref[...] * gate.astype(o_ref.dtype)


def _se_pool_gate_kernel(w_ref, x_ref, gate_ref, acc_ref, *, k, inv_hw):
    # Pass 1 of the last-resort two-pass path: HW-tiled reduction -> gate.
    h = pl.program_id(1)

    @pl.when(h == 0)
    def _():
        acc_ref[...] = jnp.zeros_like(acc_ref)

    acc_ref[...] += jnp.sum(x_ref[...], axis=-1, keepdims=True, dtype=jnp.float32)

    @pl.when(h == pl.num_programs(1) - 1)
    def _():
        gate_ref[...] = _gate_from_pooled(acc_ref[...] * inv_hw, w_ref, k)


def _se_scale_kernel(gate_ref, x_ref, o_ref):
    # Pass 2: broadcast multiply over lane-dense HW tiles.
    o_ref[...] = x_ref[...] * gate_ref[...].astype(o_ref.dtype)


# --------------------------------- wrapper -----------------------------------

def _pick_batch_tile(B, per_b_bytes, data_budget, n_cores):
    max_tb = max(1, data_budget // (4 * per_b_bytes))      # in+out, double-buffered
    if n_cores >= 2 and B >= n_cores:
        max_tb = min(max_tb, B // n_cores)                 # >= one grid step per core
    want = max(1, -(-_TARGET_BLOCK_BYTES // per_b_bytes))  # ~4 MiB blocks
    tb = int(max(1, min(B, max_tb, want)))
    while B % tb:                                          # exact grid tiling
        tb -= 1
    return tb


def _pick_channel_tile(C, HW, itemsize, data_budget, halo_c, max_c_tile=None):
    if C % 8 or C % halo_c:
        return None
    hi = C if max_c_tile is None else min(C, max_c_tile)
    for c_tile in range((hi // 8) * 8, 0, -8):             # largest tile that fits
        if C % c_tile or c_tile % halo_c:
            continue
        if 4 * (c_tile + halo_c) * HW * itemsize <= data_budget:
            return c_tile
    return None


def se_block_pallas(x, conv_weight, *, force_path=None, c_tile=None, hw_tile=None):
    """x: (B, C, H, W).  conv_weight: (k,) Conv1d(1,1,k,bias=False) taps."""
    B, C, H, W = x.shape
    HW = H * W
    itemsize = x.dtype.itemsize
    w = conv_weight.reshape(-1).astype(jnp.float32)
    k = int(w.shape[0])
    pad = (k - 1) // 2
    inv_hw = 1.0 / float(HW)
    halo_c = max(8, _round_up(max(pad, 1), 8))

    x_flat = x.reshape(B, C, HW)                            # free (metadata only)
    vmem_cap, n_cores = _tpu_vmem_and_cores()
    data_budget, limit_cap = _budgets(vmem_cap)

    per_b_bytes = C * HW * itemsize
    fused_fits = 4 * per_b_bytes <= data_budget

    def _vmem_limit(data_bytes):
        return int(min(max(data_bytes * 5 // 4, 16 << 20), limit_cap))

    path = force_path
    if path is None:
        if fused_fits:
            path = "fused"
            if n_cores >= 2 and B == 1:
                # Give the second TensorCore work via a parallel channel axis.
                ct = _pick_channel_tile(C, HW, itemsize, data_budget, halo_c,
                                        max_c_tile=C // 2)
                if ct is not None and ct >= 4 * halo_c:
                    path, c_tile = "ctile", ct
        else:
            ct = _pick_channel_tile(C, HW, itemsize, data_budget, halo_c)
            if ct is not None and ct > 2 * halo_c:          # halo overhead < 2-pass cost
                path, c_tile = "ctile", ct
            else:
                path = "twopass"

    # ------------------- fused single-pass: whole (C, HW) slab -------------------
    if path == "fused":
        tb = _pick_batch_tile(B, per_b_bytes, data_budget, n_cores)
        out = pl.pallas_call(
            functools.partial(_se_fused_kernel, k=k, inv_hw=inv_hw),
            out_shape=jax.ShapeDtypeStruct((B, C, HW), x.dtype),
            grid_spec=pltpu.PrefetchScalarGridSpec(
                num_scalar_prefetch=0,
                grid=(B // tb,),
                in_specs=[
                    pl.BlockSpec(memory_space=pltpu.MemorySpace.SMEM),   # conv taps
                    pl.BlockSpec((tb, C, HW), lambda b: (b, 0, 0)),
                ],
                out_specs=pl.BlockSpec((tb, C, HW), lambda b: (b, 0, 0)),
            ),
            compiler_params=pltpu.CompilerParams(
                dimension_semantics=("parallel",),
                vmem_limit_bytes=_vmem_limit(4 * tb * per_b_bytes)),
            cost_estimate=pl.CostEstimate(
                flops=int(2 * B * C * HW),
                transcendentals=int(B * C),
                bytes_accessed=int(2 * B * C * HW * itemsize)),
        )(w, x_flat)
        return out.reshape(B, C, H, W)

    # ----------------- channel-tiled single pass with +/- halo -----------------
    if path == "ctile":
        if c_tile is None:
            c_tile = _pick_channel_tile(C, HW, itemsize, data_budget, halo_c)
        ok = (c_tile is not None and C % 8 == 0 and C % halo_c == 0
              and c_tile % 8 == 0 and C % c_tile == 0 and c_tile % halo_c == 0)
        if not ok:
            path = "twopass"                               # cannot tile channels cleanly
        else:
            c_tile = int(c_tile)
            r = c_tile // halo_c
            n_hblk = C // halo_c
            n_c = C // c_tile
            data_bytes = 4 * (c_tile + halo_c) * HW * itemsize
            out = pl.pallas_call(
                functools.partial(_se_ctile_kernel, k=k, inv_hw=inv_hw, n_channels=C),
                out_shape=jax.ShapeDtypeStruct((B, C, HW), x.dtype),
                grid_spec=pltpu.PrefetchScalarGridSpec(
                    num_scalar_prefetch=0,
                    grid=(B, n_c),
                    in_specs=[
                        pl.BlockSpec(memory_space=pltpu.MemorySpace.SMEM),
                        pl.BlockSpec((1, c_tile, HW), lambda b, ci: (b, ci, 0)),
                        # low halo: channels [ci*c_tile - halo_c, ci*c_tile); clamped,
                        # out-of-range channels are masked to zero in-kernel.
                        pl.BlockSpec((1, halo_c, HW),
                                     lambda b, ci: (b, jnp.maximum(ci * r - 1, 0), 0)),
                        # high halo: channels [(ci+1)*c_tile, (ci+1)*c_tile + halo_c)
                        pl.BlockSpec((1, halo_c, HW),
                                     lambda b, ci: (b, jnp.minimum((ci + 1) * r,
                                                                   n_hblk - 1), 0)),
                    ],
                    out_specs=pl.BlockSpec((1, c_tile, HW), lambda b, ci: (b, ci, 0)),
                ),
                compiler_params=pltpu.CompilerParams(
                    dimension_semantics=("parallel", "parallel"),
                    vmem_limit_bytes=_vmem_limit(data_bytes)),
                cost_estimate=pl.CostEstimate(
                    flops=int(2 * B * C * HW),
                    transcendentals=int(B * C),
                    bytes_accessed=int((2 * C + 2 * halo_c * (C // c_tile))
                                       * B * HW * itemsize)),
            )(w, x_flat, x_flat, x_flat)
            return out.reshape(B, C, H, W)

    # ----------- last-resort two-pass path: HW-tiled pool+gate, then scale -----------
    HW_128 = _round_up(HW, 128)
    n_lanes = HW_128 // 128
    if hw_tile is not None:
        hw_tile = int(hw_tile)
        if hw_tile % 128 or HW_128 % hw_tile:
            hw_tile = None
    if hw_tile is None:
        best = 1
        for t in range(1, n_lanes + 1):
            if n_lanes % t:
                continue
            tile_bytes = C * t * 128 * itemsize
            if 4 * tile_bytes > data_budget:
                break
            best = t
            if tile_bytes >= _TARGET_BLOCK_BYTES:
                break
        hw_tile = best * 128
    n_hw = HW_128 // hw_tile
    tile_bytes = C * hw_tile * itemsize

    x_p = x_flat if HW_128 == HW else jnp.pad(
        x_flat, ((0, 0), (0, 0), (0, HW_128 - HW)))         # pad only to 128 lanes

    gate = pl.pallas_call(
        functools.partial(_se_pool_gate_kernel, k=k, inv_hw=inv_hw),
        out_shape=jax.ShapeDtypeStruct((B, C, 1), jnp.float32),
        grid_spec=pltpu.PrefetchScalarGridSpec(
            num_scalar_prefetch=0,
            grid=(B, n_hw),
            in_specs=[
                pl.BlockSpec(memory_space=pltpu.MemorySpace.SMEM),
                pl.BlockSpec((1, C, hw_tile), lambda b, h: (b, 0, h)),
            ],
            out_specs=pl.BlockSpec((1, C, 1), lambda b, h: (b, 0, 0)),
            scratch_shapes=[pltpu.VMEM((1, C, 1), jnp.float32)],
        ),
        compiler_params=pltpu.CompilerParams(
            dimension_semantics=("parallel", "arbitrary"),
            vmem_limit_bytes=_vmem_limit(2 * tile_bytes)),
        cost_estimate=pl.CostEstimate(
            flops=int(B * C * HW),
            transcendentals=int(B * C),
            bytes_accessed=int(B * C * HW * itemsize)),
    )(w, x_p)

    out = pl.pallas_call(
        _se_scale_kernel,
        out_shape=jax.ShapeDtypeStruct((B, C, HW_128), x.dtype),
        grid_spec=pltpu.PrefetchScalarGridSpec(
            num_scalar_prefetch=0,
            grid=(B, n_hw),
            in_specs=[
                pl.BlockSpec((1, C, 1), lambda b, h: (b, 0, 0)),
                pl.BlockSpec((1, C, hw_tile), lambda b, h: (b, 0, h)),
            ],
            out_specs=pl.BlockSpec((1, C, hw_tile), lambda b, h: (b, 0, h)),
        ),
        compiler_params=pltpu.CompilerParams(
            dimension_semantics=("parallel", "parallel"),
            vmem_limit_bytes=_vmem_limit(4 * tile_bytes)),
        cost_estimate=pl.CostEstimate(
            flops=int(B * C * HW),
            transcendentals=0,
            bytes_accessed=int(2 * B * C * HW * itemsize)),
    )(gate, x_p)

    if HW_128 != HW:
        out = out[:, :, :HW]
    return out.reshape(B, C, H, W)


def se_block_ref(x, conv_weight):
    """Pure-JAX reference matching the PyTorch forward."""
    B, C, H, W = x.shape
    wt = conv_weight.reshape(-1)
    k = wt.shape[0]
    pad = (k - 1) // 2
    y = jnp.mean(x, axis=(2, 3))                             # (B, C)
    y_pad = jnp.pad(y, ((0, 0), (pad, pad)))                 # zero-pad channel axis
    conv = jnp.zeros_like(y)
    for j in range(k):
        conv = conv + wt[j] * y_pad[:, j:j + C]
    gate = jax.nn.sigmoid(conv)[:, :, None, None]            # (B, C, 1, 1)
    return x * gate


if __name__ == "__main__":
    # Small shapes: batch=2, channels=16 (-> kernel_size=3), spatial=16x16.
    B, C, H, W = 2, 16, 16, 16
    key = jax.random.PRNGKey(0)
    kx, kw_ = jax.random.split(key)

    x = jax.random.normal(kx, (B, C, H, W), dtype=jnp.float32)

    k = _eca_kernel_size(C)                                   # = 3 for C = 16
    bound = 1.0 / math.sqrt(k)
    conv_weight = jax.random.uniform(kw_, (k,), minval=-bound, maxval=bound,
                                     dtype=jnp.float32)

    ref = se_block_ref(x, conv_weight)

    # Default routing -> fused single-pass path (no wrapper pad/slice).
    out = jax.block_until_ready(se_block_pallas(x, conv_weight))
    assert jnp.allclose(out, ref, atol=1e-5, rtol=1e-5), "fused path mismatch"

    # Channel-tiled halo path, forced with two channel tiles of 8.
    out_ct = jax.block_until_ready(
        se_block_pallas(x, conv_weight, force_path="ctile", c_tile=8))
    assert jnp.allclose(out_ct, ref, atol=1e-5, rtol=1e-5), "ctile path mismatch"

    # Last-resort two-pass path, forced with two 128-lane HW tiles.
    out_tp = jax.block_until_ready(
        se_block_pallas(x, conv_weight, force_path="twopass", hw_tile=128))
    assert jnp.allclose(out_tp, ref, atol=1e-5, rtol=1e-5), "two-pass path mismatch"

    # Non-multiple-of-128 spatial size: exercises the unpadded fused path where
    # only the final partial lane column is masked by the store.
    x2 = jax.random.normal(kx, (B, C, 10, 10), dtype=jnp.float32)
    ref2 = se_block_ref(x2, conv_weight)
    out2 = jax.block_until_ready(se_block_pallas(x2, conv_weight))
    assert jnp.allclose(out2, ref2, atol=1e-5, rtol=1e-5), "odd-HW fused mismatch"

    print("KERNEL_OK")
</pallas_src>

<mosaic_0001>
module attributes {stable_mosaic.version = 11 : i64} {
  func.func @_se_fused_kernel(%arg0: i32, %arg1: memref<3xf32, #tpu.memory_space<smem>>, %arg2: memref<2x16x256xf32, #tpu.memory_space<vmem>>, %arg3: memref<2x16x256xf32, #tpu.memory_space<vmem>>) attributes {dimension_semantics = [#tpu.dimension_semantics<parallel>], iteration_bounds = array<i64: 1>, scalar_prefetch = 0 : i64, scratch_operands = 0 : i64, tpu.core_type = #tpu.core_type<tc>, window_params = [{transform_indices = @transform_0, window_bounds = array<i64: 3>}, {transform_indices = @transform_1, window_bounds = array<i64: 2, 16, 256>}, {transform_indices = @transform_2, window_bounds = array<i64: 2, 16, 256>}]} {
    %c0 = arith.constant 0 : index
    %c0_0 = arith.constant 0 : index
    %c0_1 = arith.constant 0 : index
    %0 = vector.load %arg2[%c0, %c0_0, %c0_1] : memref<2x16x256xf32, #tpu.memory_space<vmem>>, vector<2x16x256xf32>
    %cst = arith.constant dense<0.000000e+00> : vector<2x16xf32>
    %1 = vector.multi_reduction <add>, %0, %cst [2] : vector<2x16x256xf32> to vector<2x16xf32>
    %2 = vector.shape_cast %1 : vector<2x16xf32> to vector<2x16x1xf32>
    %cst_2 = arith.constant 3.906250e-03 : f32
    %3 = vector.broadcast %cst_2 : f32 to vector<2x16x1xf32>
    %4 = arith.mulf %2, %3 : vector<2x16x1xf32>
    %5 = tpu.iota {dimensions = array<i32: 1>} : vector<2x16x1xi32>
    %cst_3 = arith.constant 0.000000e+00 : f32
    %6 = vector.broadcast %cst_3 : f32 to vector<2x16x1xf32>
    %c0_4 = arith.constant 0 : index
    %7 = memref.load %arg1[%c0_4] : memref<3xf32, #tpu.memory_space<smem>>
    %c1_i32 = arith.constant 1 : i32
    %8 = tpu.dynamic_rotate %4 by %c1_i32 dim 1 : vector<2x16x1xf32>, i32 -> vector<2x16x1xf32>
    %c1_i32_5 = arith.constant 1 : i32
    %9 = vector.broadcast %c1_i32_5 : i32 to vector<2x16x1xi32>
    %10 = arith.cmpi sge, %5, %9 : vector<2x16x1xi32>
    %cst_6 = arith.constant 0.000000e+00 : f32
    %11 = vector.broadcast %cst_6 : f32 to vector<2x16x1xf32>
    %12 = arith.select %10, %8, %11 : vector<2x16x1xi1>, vector<2x16x1xf32>
    %13 = vector.broadcast %7 : f32 to vector<2x16x1xf32>
    %14 = arith.mulf %13, %12 : vector<2x16x1xf32>
    %15 = arith.addf %6, %14 : vector<2x16x1xf32>
    %c1 = arith.constant 1 : index
    %16 = memref.load %arg1[%c1] : memref<3xf32, #tpu.memory_space<smem>>
    %17 = vector.broadcast %16 : f32 to vector<2x16x1xf32>
    %18 = arith.mulf %17, %4 : vector<2x16x1xf32>
    %19 = arith.addf %15, %18 : vector<2x16x1xf32>
    %c2 = arith.constant 2 : index
    %20 = memref.load %arg1[%c2] : memref<3xf32, #tpu.memory_space<smem>>
    %c15_i32 = arith.constant 15 : i32
    %21 = tpu.dynamic_rotate %4 by %c15_i32 dim 1 : vector<2x16x1xf32>, i32 -> vector<2x16x1xf32>
    %c15_i32_7 = arith.constant 15 : i32
    %22 = vector.broadcast %c15_i32_7 : i32 to vector<2x16x1xi32>
    %23 = arith.cmpi slt, %5, %22 : vector<2x16x1xi32>
    %cst_8 = arith.constant 0.000000e+00 : f32
    %24 = vector.broadcast %cst_8 : f32 to vector<2x16x1xf32>
    %25 = arith.select %23, %21, %24 : vector<2x16x1xi1>, vector<2x16x1xf32>
    %26 = vector.broadcast %20 : f32 to vector<2x16x1xf32>
    %27 = arith.mulf %26, %25 : vector<2x16x1xf32>
    %28 = arith.addf %19, %27 : vector<2x16x1xf32>
    %29 = arith.negf %28 : vector<2x16x1xf32>
    %30 = math.exp %29 : vector<2x16x1xf32>
    %cst_9 = arith.constant 1.000000e+00 : f32
    %31 = vector.broadcast %cst_9 : f32 to vector<2x16x1xf32>
    %32 = arith.addf %31, %30 : vector<2x16x1xf32>
    %33 = arith.divf %31, %32 : vector<2x16x1xf32>
    %c0_10 = arith.constant 0 : index
    %c0_11 = arith.constant 0 : index
    %c0_12 = arith.constant 0 : index
    %34 = vector.load %arg2[%c0_10, %c0_11, %c0_12] : memref<2x16x256xf32, #tpu.memory_space<vmem>>, vector<2x16x256xf32>
    %35 = vector.broadcast %33 : vector<2x16x1xf32> to vector<2x16x256xf32>
    %36 = arith.mulf %34, %35 : vector<2x16x256xf32>
    %c0_13 = arith.constant 0 : index
    %c0_14 = arith.constant 0 : index
    %c0_15 = arith.constant 0 : index
    %37 = vector.load %arg3[%c0_13, %c0_14, %c0_15] : memref<2x16x256xf32, #tpu.memory_space<vmem>>, vector<2x16x256xf32>
    tpu.vector_store %arg3[%c0_13, %c0_14, %c0_15], %36 {strides = array<i32>} : memref<2x16x256xf32, #tpu.memory_space<vmem>>, vector<2x16x256xf32>,
    return
  }
  func.func @transform_0(%arg0: i32) -> i32 {
    %c0_i32 = arith.constant 0 : i32
    %c0_i32_0 = arith.constant 0 : i32
    return %c0_i32 : i32
  }
  func.func @transform_1(%arg0: i32) -> (i32, i32, i32) {
    %c0_i32 = arith.constant 0 : i32
    %c0_i32_0 = arith.constant 0 : i32
    %c0_i32_1 = arith.constant 0 : i32
    return %arg0, %c0_i32, %c0_i32_0 : i32, i32, i32
  }
  func.func @transform_2(%arg0: i32) -> (i32, i32, i32) {
    %c0_i32 = arith.constant 0 : i32
    %c0_i32_0 = arith.constant 0 : i32
    %c0_i32_1 = arith.constant 0 : i32
    return %arg0, %c0_i32, %c0_i32_0 : i32, i32, i32
  }
}

</mosaic_0001>

<llo_original>
// kernel: tpu_custom_call.1
$region0: #{tpu_custom_call.1}
  #allocation0 [shape = 'u32[]', space=smem, size = 0x4, offset = 0x4, fixed_abs, tag = 'smem constant byte address 0x4 - core index']
  #allocation1 [shape = 'u32[144,128]{1,0:T(1,128)}', space=vmem, size = 0x12000, scoped, tag = 'internal scratch']
  %s0 = inlined_call_operand.hbm [shape: f32[3], index: 0, kind: input, shape index: {}]
  %s1 = inlined_call_operand.hbm [shape: f32[2,16,256], index: 1, kind: input, shape index: {}]
  %s2 = inlined_call_operand.hbm [shape: f32[2,16,256], index: 2, kind: output, shape index: {}]
  %s3 = sld [smem:[#allocation0]]
  $region26: #{tpu_custom_call.1} parent=0
    _
  %s5 = ssub.s32 1, %s3
  %s6 = scalar_select 0, %s5, %s3
  $region1: #{tpu_custom_call.1} parent=0
    #allocation2 [shape = 'u8[512]{0}', space=smem, size = 0x200, scoped, tag = 'input window, operand 0, single buffered']
    #allocation3 [shape = 's32[1]{0}', space=sflag, size = 0x4, scoped, tag = 'scoped memory for tpu_custom_call.1']
    #allocation4 [shape = 's32[1]{0}', space=sflag, size = 0x4, scoped, tag = 'scoped memory for tpu_custom_call.1']
    #allocation5 [shape = 's32[1]{0}', space=sflag, size = 0x4, scoped, tag = 'scoped memory for tpu_custom_call.1']
    #allocation6 [shape = 'u8[32768]{0}', space=vmem, size = 0x8000, scoped, tag = 'input window, operand 1, single buffered']
    #allocation7 [shape = 'u8[32768]{0}', space=vmem, size = 0x8000, scoped, tag = 'output window, operand 0, single buffered']
    %7 = vsyncpa [#allocation5], 0
    %8 = vsyncpa [#allocation3], 0
    %9 = vsyncpa [#allocation4], 0
    // Predicated region
    $region2: #{tpu_custom_call.1} parent=1 // pred_check
      _
    $region3: #{tpu_custom_call.1} parent=1 // pred_check_branch
      %11 = sbr.rel (0) target = $region5
    $region4: #{tpu_custom_call.1} parent=1 // pred_region
      %s13 = ssub.s32 16, 16
      %14 = vsyncadd [#allocation5], %s13
      %17 = dma.hbm_to_smem %s0, 16, [#allocation2], [#allocation5]
    $region5: #{tpu_custom_call.1} parent=1 // pred_fallthru
      _
    // Predicated region
    $region6: #{tpu_custom_call.1} parent=1 // pred_check
      _
    $region7: #{tpu_custom_call.1} parent=1 // pred_check_branch
      %19 = sbr.rel (0) target = $region9
    $region8: #{tpu_custom_call.1} parent=1 // pred_region
      %s21 = ssub.s32 1024, 1024
      %22 = vsyncadd [#allocation3], %s21
      %s23 = sshll.u32 [#allocation6], 4
      %s24 = int_to_ptr.vmem [resolvable:$true] %s23
      %29 = dma.hbm_to_vmem [thread:$0]  %s1, 1024, %s24, [#allocation3], 256, 256, 16
    $region9: #{tpu_custom_call.1} parent=1 // pred_fallthru
      _
    // Predicated region
    $region10: #{tpu_custom_call.1} parent=1 // pred_check
      _
    $region11: #{tpu_custom_call.1} parent=1 // pred_check_branch
      %31 = sbr.rel (0) target = $region13
    $region12: #{tpu_custom_call.1} parent=1 // pred_region
      %32 = dma.done [#allocation5], 16
    $region13: #{tpu_custom_call.1} parent=1 // pred_fallthru
      _
    // Predicated region
    $region14: #{tpu_custom_call.1} parent=1 // pred_check
      _
    $region15: #{tpu_custom_call.1} parent=1 // pred_check_branch
      %34 = sbr.rel (0) target = $region17
    $region16: #{tpu_custom_call.1} parent=1 // pred_region
      %35 = dma.done [#allocation3], 1024
    $region17: #{tpu_custom_call.1} parent=1 // pred_fallthru
      _
    %36 = sfence
    %v37 = vld [vmem:[#allocation6] sm:$0xff]
    %v38 = vld [vmem:[#allocation6 + $0x8] sm:$0xff]
    %v39 = vld [vmem:[#allocation6 + $0x10] sm:$0xff]
    %v40 = vld [vmem:[#allocation6 + $0x18] sm:$0xff]
    %v41 = vld [vmem:[#allocation6 + $0x20] sm:$0xff]
    %v42 = vld [vmem:[#allocation6 + $0x28] sm:$0xff]
    %v43 = vld [vmem:[#allocation6 + $0x30] sm:$0xff]
    %v44 = vld [vmem:[#allocation6 + $0x38] sm:$0xff]
    %v45 = vadd.f32 %v37, %v38
    %46 = vadd.xlane.f32.xlu0 %v45
    %v47 = vpop.xlane.xlu0 %46
    %v48 = vadd.f32 %v39, %v40
    %49 = vadd.xlane.f32.xlu0 %v48
    %v50 = vpop.xlane.xlu0 %49
    %v51 = vadd.f32 %v41, %v42
    %52 = vadd.xlane.f32.xlu0 %v51
    %v53 = vpop.xlane.xlu0 %52
    %v54 = vadd.f32 %v43, %v44
    %55 = vadd.xlane.f32.xlu0 %v54
    %v56 = vpop.xlane.xlu0 %55
    %v57 = vmul.f32 %v47, 0.00390625
    %v58 = vmul.f32 %v50, 0.00390625
    %v59 = vmul.f32 %v53, 0.00390625
    %v60 = vmul.f32 %v56, 0.00390625
    %v61 = vlaneseq
    %v62 = vshrl.u32 %v61, 7
    %v63 = vadd.s32 %v62, 8
    %s64 = sld [smem:[#allocation2]]
    %v65 = vrot.slane %v57, 7
    %v66 = vrot.slane %v59, 7
    %v67 = vrot.slane %v58, 7
    %v68 = vrot.slane %v60, 7
    %vm69 = vcmp.lt.s32.totalorder %v62, 1
    %v70 = vsel %vm69, %v65, %v67
    %v71 = vsel %vm69, %v66, %v68
    %v72 = vsel %vm69, %v67, %v65
    %v73 = vsel %vm69, %v68, %v66
    %vm74 = vcmp.ge.s32.totalorder %v62, 1
    %vm75 = vcmp.ge.s32.totalorder %v63, 1
    %v76 = vsel %vm74, %v72, 0.0
    %v77 = vsel %vm75, %v70, 0.0
    %v78 = vsel %vm74, %v73, 0.0
    %v79 = vsel %vm75, %v71, 0.0
    %v80 = vstv %s64
    %v81 = vmul.f32 %v80, %v76
    %v82 = vmul.f32 %v80, %v77
    %v83 = vmul.f32 %v80, %v78
    %v84 = vmul.f32 %v80, %v79
    %v85 = vadd.f32 %v81, 0.0
    %v86 = vadd.f32 %v82, 0.0
    %v87 = vadd.f32 %v83, 0.0
    %v88 = vadd.f32 %v84, 0.0
    %s89 = sld [smem:[#allocation2 + $0x1]]
    %v90 = vstv %s89
    %v91 = vmul.f32 %v90, %v57
    %v92 = vmul.f32 %v90, %v58
    %v93 = vmul.f32 %v90, %v59
    %v94 = vmul.f32 %v90, %v60
    %v95 = vadd.f32 %v85, %v91
    %v96 = vadd.f32 %v86, %v92
    %v97 = vadd.f32 %v87, %v93
    %v98 = vadd.f32 %v88, %v94
    %s99 = sld [smem:[#allocation2 + $0x2]]
    %v100 = vrot.slane %v57, 1
    %v101 = vrot.slane %v59, 1
    %v102 = vrot.slane %v58, 1
    %v103 = vrot.slane %v60, 1
    %vm104 = vcmp.lt.s32.totalorder %v62, 7
    %v105 = vsel %vm104, %v100, %v102
    %v106 = vsel %vm104, %v101, %v103
    %v107 = vsel %vm104, %v102, %v100
    %v108 = vsel %vm104, %v103, %v101
    %vm109 = vcmp.lt.s32.totalorder %v62, 15
    %vm110 = vcmp.lt.s32.totalorder %v63, 15
    %v111 = vsel %vm109, %v105, 0.0
    %v112 = vsel %vm110, %v107, 0.0
    %v113 = vsel %vm109, %v106, 0.0
    %v114 = vsel %vm110, %v108, 0.0
    %v115 = vstv %s99
    %v116 = vmul.f32 %v115, %v111
    %v117 = vmul.f32 %v115, %v112
    %v118 = vmul.f32 %v115, %v113
    %v119 = vmul.f32 %v115, %v114
    %v120 = vadd.f32 %v95, %v116
    %v121 = vadd.f32 %v96, %v117
    %v122 = vadd.f32 %v97, %v118
    %v123 = vadd.f32 %v98, %v119
    %v124 = vxor.u32 %v120, 2147483648
    %v125 = vxor.u32 %v121, 2147483648
    %v126 = vxor.u32 %v122, 2147483648
    %v127 = vxor.u32 %v123, 2147483648
    %v128 = vmul.f32 %v124, 1.442695
    %v129 = vpow.pop %v128
    %v130 = vmul.f32 %v125, 1.442695
    %v131 = vpow.pop %v130
    %v132 = vmul.f32 %v126, 1.442695
    %v133 = vpow.pop %v132
    %v134 = vmul.f32 %v127, 1.442695
    %v135 = vpow.pop %v134
    %v136 = vadd.f32 %v129, 1.0
    %v137 = vadd.f32 %v131, 1.0
    %v138 = vadd.f32 %v133, 1.0
    %v139 = vadd.f32 %v135, 1.0
    %v140 = vrcp.pop %v136
    %v141 = vmul.f32 1.0, %v140
    %v142 = vrcp.pop %v137
    %v143 = vmul.f32 1.0, %v142
    %v144 = vrcp.pop %v138
    %v145 = vmul.f32 1.0, %v144
    %v146 = vrcp.pop %v139
    %v147 = vmul.f32 1.0, %v146
    %149 = vset.pattern.permute.xlu0 0
    %150 = vperm.xlu0 %149, %v141
    %v151 = vpop.permute.xlu0 %150
    %154 = vset.pattern.permute.xlu0 0
    %155 = vperm.xlu0 %154, %v143
    %v156 = vpop.permute.xlu0 %155
    %159 = vset.pattern.permute.xlu0 0
    %160 = vperm.xlu0 %159, %v145
    %v161 = vpop.permute.xlu0 %160
    %164 = vset.pattern.permute.xlu0 0
    %165 = vperm.xlu0 %164, %v147
    %v166 = vpop.permute.xlu0 %165
    %v168 = vmul.f32 %v37, %v151
    %v169 = vmul.f32 %v38, %v151
    %v170 = vmul.f32 %v39, %v156
    %v171 = vmul.f32 %v40, %v156
    %v172 = vmul.f32 %v41, %v161
    %v173 = vmul.f32 %v42, %v161
    %v174 = vmul.f32 %v43, %v166
    %v175 = vmul.f32 %v44, %v166
    %176 = vst [vmem:[#allocation7] sm:$0xff] %v168
    %177 = vst [vmem:[#allocation7 + $0x8] sm:$0xff] %v169
    %178 = vst [vmem:[#allocation7 + $0x10] sm:$0xff] %v170
    %179 = vst [vmem:[#allocation7 + $0x18] sm:$0xff] %v171
    %180 = vst [vmem:[#allocation7 + $0x20] sm:$0xff] %v172
    %181 = vst [vmem:[#allocation7 + $0x28] sm:$0xff] %v173
    %182 = vst [vmem:[#allocation7 + $0x30] sm:$0xff] %v174
    %183 = vst [vmem:[#allocation7 + $0x38] sm:$0xff] %v175
    // Predicated region
    $region18: #{tpu_custom_call.1} parent=1 // pred_check
      _
    $region19: #{tpu_custom_call.1} parent=1 // pred_check_branch
      %185 = sbr.rel (0) target = $region21
    $region20: #{tpu_custom_call.1} parent=1 // pred_region
      %s187 = ssub.s32 1024, 1024
      %188 = vsyncadd [#allocation4], %s187
      %s189 = sshll.u32 [#allocation7], 4
      %s190 = int_to_ptr.vmem [resolvable:$true] %s189
      %195 = dma.vmem_to_hbm [thread:$0]  %s190, 1024, %s2, [#allocation4], 256, 256, 16
    $region21: #{tpu_custom_call.1} parent=1 // pred_fallthru
      _
    // Predicated region
    $region22: #{tpu_custom_call.1} parent=1 // pred_check
      _
    $region23: #{tpu_custom_call.1} parent=1 // pred_check_branch
      %197 = sbr.rel (0) target = $region25
    $region24: #{tpu_custom_call.1} parent=1 // pred_region
      %198 = dma.done [#allocation4], 1024
    $region25: #{tpu_custom_call.1} parent=1 // pred_fallthru
      _
    %199 = vsyncpa [#allocation3], 1
    %200 = vsyncpa [#allocation4], 1
    %201 = vsyncpa [#allocation5], 1

</llo_original>
